<compile_context>
chip_gen: v6e
topology: v6e:2x2x1
jax: 0.10.0
libtpu: 0.0.40
codegen_flags: <defaults>
</compile_context>

<pallas_src>
import numpy as np
import jax
import jax.numpy as jnp
from jax.experimental import pallas as pl
from jax.experimental.pallas import tpu as pltpu

_LANE = 128
_MAX_PACKED_W_BYTES = 8 << 20   # don't let block-diag packing blow up VMEM


def _round_up(x, m):
    return ((x + m - 1) // m) * m


def _actor_head_kernel(x_ref, w_ref, b_ref, o_ref):
    # MXU matmul (f32 accumulate), then bias add (VPU) + tanh (EUP) in f32.
    y = jnp.dot(x_ref[...], w_ref[...], preferred_element_type=jnp.float32)
    o_ref[...] = jnp.tanh(y + b_ref[...]).astype(o_ref.dtype)


def prepare_actor_params(w_action, b_action, *, param_dtype=jnp.float32):
    """One-time (init-time) packing of fc_action parameters.

    w_action: (state_dim, action_dim)  -- torch fc_action.weight, transposed
    b_action: (action_dim,)
    Returns (w_blk, b_blk, pack):
      pack  : batch rows packed per 128-lane output row (1 if not applicable)
      w_blk : (pack*state_dim, pack*action_dim) block-diagonal weight
      b_blk : (1, pack*action_dim) f32 tiled bias
    """
    S, A = w_action.shape
    pack = _LANE // A if (A < _LANE and _LANE % A == 0) else 1
    if pack > 1 and (pack * S) * (pack * A) * jnp.dtype(param_dtype).itemsize \
            > _MAX_PACKED_W_BYTES:
        pack = 1
    w = w_action.astype(param_dtype)
    # kron(I_pack, W) = block-diagonal with `pack` copies of W.
    w_blk = jnp.kron(jnp.eye(pack, dtype=param_dtype), w)
    b_blk = jnp.tile(jnp.reshape(b_action.astype(jnp.float32), (1, A)), (1, pack))
    return w_blk, b_blk, pack


def deterministic_actor_critic_forward(obs, w_blk, b_blk, pack, *,
                                       tile_b=4096, out_dtype=jnp.float32):
    """Actor path of DeterministicActorCriticNet.forward.

    obs:   (B, state_dim)
    w_blk, b_blk, pack: from prepare_actor_params (built once at init time)
    returns: (B, action_dim) = tanh(obs @ W_action^T + b_action)
    """
    B, S = obs.shape
    K, N = w_blk.shape
    assert K == pack * S and N % pack == 0
    A = N // pack

    # Pack `pack` batch rows per output row (contiguous reshape).  Only the
    # batch tail (< pack rows) is ever zero-padded; never padded to the tile.
    B_pad = _round_up(B, pack)
    obs_p = obs if B_pad == B else jnp.pad(obs, ((0, B_pad - B), (0, 0)))
    R = B_pad // pack
    x = obs_p.reshape(R, K)

    # Batch tile: big (default 4096 obs rows per step), multiple of 8 sublanes,
    # and at most ceil(R/2) so a 2-TensorCore chip (v7x) gets >= 2 steps on the
    # "parallel" grid axis whenever the batch allows it.
    tile_r = max(8, _round_up(max(tile_b // pack, 1), 8))
    tile_r = min(tile_r, max(8, _round_up(pl.cdiv(R, 2), 8)))
    grid = (pl.cdiv(R, tile_r),)

    cost = pl.CostEstimate(
        flops=2 * B * S * A + B * A,
        transcendentals=B * A,
        bytes_accessed=(x.size * x.dtype.itemsize
                        + w_blk.size * w_blk.dtype.itemsize
                        + b_blk.size * b_blk.dtype.itemsize
                        + R * N * jnp.dtype(out_dtype).itemsize),
    )

    out = pl.pallas_call(
        _actor_head_kernel,
        out_shape=jax.ShapeDtypeStruct((R, N), out_dtype),
        grid=grid,
        in_specs=[
            pl.BlockSpec((tile_r, K), lambda i: (i, 0)),   # obs rows, streamed
            pl.BlockSpec((K, N), lambda i: (0, 0)),        # weight, VMEM-resident
            pl.BlockSpec((1, N), lambda i: (0, 0)),        # bias, VMEM-resident
        ],
        out_specs=pl.BlockSpec((tile_r, N), lambda i: (i, 0)),
        compiler_params=pltpu.CompilerParams(
            dimension_semantics=("parallel",)),
        cost_estimate=cost,
    )(x, w_blk, b_blk)

    act = out.reshape(B_pad, A)            # contiguous, zero-cost reshape
    return act if B_pad == B else act[:B]


def _orthogonal_init(key, rows, cols, scale):
    """Deterministic orthogonal init (like nn.init.orthogonal_) scaled by `scale`."""
    a = np.asarray(jax.random.normal(key, (max(rows, cols), min(rows, cols)),
                                     dtype=jnp.float32))
    q, r = np.linalg.qr(a)
    q = q * np.sign(np.diag(r))
    if rows < cols:
        q = q.T
    return jnp.asarray(q[:rows, :cols], dtype=jnp.float32) * scale


if __name__ == "__main__":
    key = jax.random.PRNGKey(0)
    k_obs, k_w = jax.random.split(key)

    batch = 8
    state_dim = 32
    action_dim = 8

    # Observations (phi_body / actor_body are identity -> phi == obs).
    obs = jax.random.normal(k_obs, (batch, state_dim), dtype=jnp.float32)

    # fc_action parameters: torch weight is (action_dim, state_dim); store the
    # transpose so the math is x @ W (== torch x @ W^T).  Bias is zero-init.
    w_torch = _orthogonal_init(k_w, action_dim, state_dim, scale=1e-3)
    w_action = jnp.transpose(w_torch)                  # (state_dim, action_dim)
    b_action = jnp.zeros((action_dim,), dtype=jnp.float32)

    # One-time parameter packing (hoisted out of the forward hot path).
    w_blk, b_blk, pack = prepare_actor_params(w_action, b_action)

    # TODO(synk): fc_critic is not exercised by forward(); if the critic value
    # is needed later, fuse its single column into the same lane-dense slab.

    action = deterministic_actor_critic_forward(obs, w_blk, b_blk, pack)
    action = jax.block_until_ready(action)

    # Reference in plain JAX.
    ref = jnp.tanh(obs @ w_action + b_action[None, :])
    np.testing.assert_allclose(np.asarray(action), np.asarray(ref),
                               rtol=1e-5, atol=1e-6)
    assert action.shape == (batch, action_dim)
    print("KERNEL_OK")
</pallas_src>

<mosaic_0001>
module attributes {stable_mosaic.version = 11 : i64} {
  func.func @_actor_head_kernel(%arg0: i32, %arg1: memref<8x512xf32, #tpu.memory_space<vmem>>, %arg2: memref<512x128xf32, #tpu.memory_space<vmem>>, %arg3: memref<1x128xf32, #tpu.memory_space<vmem>>, %arg4: memref<8x128xf32, #tpu.memory_space<vmem>>) attributes {dimension_semantics = [#tpu.dimension_semantics<parallel>], iteration_bounds = array<i64: 1>, scalar_prefetch = 0 : i64, scratch_operands = 0 : i64, tpu.core_type = #tpu.core_type<tc>, window_params = [{transform_indices = @transform_0, window_bounds = array<i64: 8, 512>}, {pipeline_mode = #tpu.pipeline_mode<synchronous>, transform_indices = @transform_1, window_bounds = array<i64: 512, 128>}, {pipeline_mode = #tpu.pipeline_mode<synchronous>, transform_indices = @transform_2, window_bounds = array<i64: 1, 128>}, {transform_indices = @transform_3, window_bounds = array<i64: 8, 128>}]} {
    %c0 = arith.constant 0 : index
    %c0_0 = arith.constant 0 : index
    %0 = vector.load %arg1[%c0, %c0_0] : memref<8x512xf32, #tpu.memory_space<vmem>>, vector<8x512xf32>
    %c0_1 = arith.constant 0 : index
    %c0_2 = arith.constant 0 : index
    %1 = vector.load %arg2[%c0_1, %c0_2] : memref<512x128xf32, #tpu.memory_space<vmem>>, vector<512x128xf32>
    %cst = arith.constant dense<0.000000e+00> : vector<8x128xf32>
    %2 = tpu.matmul %0, %1, %cst {dimension_numbers = #tpu.dot_dimension_numbers<[1], [0], [0], [1], [0, 0, 1, 1], [], []>} : vector<8x512xf32>, vector<512x128xf32>, vector<8x128xf32> -> vector<8x128xf32>
    %c0_3 = arith.constant 0 : index
    %c0_4 = arith.constant 0 : index
    %3 = vector.load %arg3[%c0_3, %c0_4] : memref<1x128xf32, #tpu.memory_space<vmem>>, vector<1x128xf32>
    %4 = vector.broadcast %3 : vector<1x128xf32> to vector<8x128xf32>
    %5 = arith.addf %2, %4 : vector<8x128xf32>
    %6 = math.tanh %5 : vector<8x128xf32>
    %c0_5 = arith.constant 0 : index
    %c0_6 = arith.constant 0 : index
    %7 = vector.load %arg4[%c0_5, %c0_6] : memref<8x128xf32, #tpu.memory_space<vmem>>, vector<8x128xf32>
    tpu.vector_store %arg4[%c0_5, %c0_6], %6 {strides = array<i32>} : memref<8x128xf32, #tpu.memory_space<vmem>>, vector<8x128xf32>,
    return
  }
  func.func @transform_0(%arg0: i32) -> (i32, i32) {
    %c0_i32 = arith.constant 0 : i32
    %c0_i32_0 = arith.constant 0 : i32
    return %arg0, %c0_i32 : i32, i32
  }
  func.func @transform_1(%arg0: i32) -> (i32, i32) {
    %c0_i32 = arith.constant 0 : i32
    %c0_i32_0 = arith.constant 0 : i32
    %c0_i32_1 = arith.constant 0 : i32
    return %c0_i32, %c0_i32_0 : i32, i32
  }
  func.func @transform_2(%arg0: i32) -> (i32, i32) {
    %c0_i32 = arith.constant 0 : i32
    %c0_i32_0 = arith.constant 0 : i32
    %c0_i32_1 = arith.constant 0 : i32
    return %c0_i32, %c0_i32_0 : i32, i32
  }
  func.func @transform_3(%arg0: i32) -> (i32, i32) {
    %c0_i32 = arith.constant 0 : i32
    %c0_i32_0 = arith.constant 0 : i32
    return %arg0, %c0_i32 : i32, i32
  }
}

</mosaic_0001>

<llo_original>
// kernel: tpu_custom_call.1
$region0: #{tpu_custom_call.1}
  #allocation0 [shape = 'u32[]', space=smem, size = 0x4, offset = 0x4, fixed_abs, tag = 'smem constant byte address 0x4 - core index']
  #allocation1 [shape = 'u32[144,128]{1,0:T(1,128)}', space=vmem, size = 0x12000, scoped, tag = 'internal scratch']
  %s0 = inlined_call_operand.hbm [shape: f32[1,512], index: 0, kind: input, shape index: {}]
  %s1 = inlined_call_operand.hbm [shape: f32[512,128], index: 1, kind: input, shape index: {}]
  %s2 = inlined_call_operand.vmem [shape: f32[1,128], index: 2, kind: input, shape index: {}]
  %s3 = inlined_call_operand.hbm [shape: f32[1,128], index: 3, kind: output, shape index: {}]
  %s4 = sld [smem:[#allocation0]]
  $region30: #{tpu_custom_call.1} parent=0
    _
  %s6 = ssub.s32 1, %s4
  %s7 = scalar_select 0, %s6, %s4
  $region1: #{tpu_custom_call.1} parent=0
    #allocation2 [shape = 'u8[16384]{0}', space=vmem, size = 0x4000, scoped, tag = 'input window, operand 0, single buffered']
    #allocation3 [shape = 's32[1]{0}', space=sflag, size = 0x4, scoped, tag = 'scoped memory for tpu_custom_call.1']
    #allocation4 [shape = 's32[1]{0}', space=sflag, size = 0x4, scoped, tag = 'scoped memory for tpu_custom_call.1']
    #allocation5 [shape = 'u8[262144]{0}', space=vmem, size = 0x40000, scoped, tag = 'input window, operand 1, single buffered']
    #allocation6 [shape = 's32[1]{0}', space=sflag, size = 0x4, scoped, tag = 'scoped memory for tpu_custom_call.1']
    #allocation7 [shape = 'u8[4096]{0}', space=vmem, size = 0x1000, scoped, tag = 'output window, operand 0, single buffered']
    %8 = vsyncpa [#allocation3], 0
    %9 = vsyncpa [#allocation6], 0
    %10 = vsyncpa [#allocation4], 0
    // Predicated region
    $region2: #{tpu_custom_call.1} parent=1 // pred_check
      _
    $region3: #{tpu_custom_call.1} parent=1 // pred_check_branch
      %12 = sbr.rel (0) target = $region5
    $region4: #{tpu_custom_call.1} parent=1 // pred_region
      %s14 = ssub.s32 512, 64
      %15 = vsyncadd [#allocation3], %s14
      %s16 = sshll.u32 [#allocation2], 4
      %s17 = int_to_ptr.vmem [resolvable:$true] %s16
      %22 = dma.hbm_to_vmem [thread:$0]  %s0, 64, %s17, [#allocation3], 64, 64, 4
    $region5: #{tpu_custom_call.1} parent=1 // pred_fallthru
      _
    // Predicated region
    $region6: #{tpu_custom_call.1} parent=1 // pred_check
      _
    $region7: #{tpu_custom_call.1} parent=1 // pred_check_branch
      %24 = sbr.rel (0) target = $region9
    $region8: #{tpu_custom_call.1} parent=1 // pred_region
      %s26 = ssub.s32 8192, 8192
      %27 = vsyncadd [#allocation6], %s26
      %s28 = sshll.u32 [#allocation5], 4
      %s29 = int_to_ptr.vmem [resolvable:$true] %s28
      %34 = dma.hbm_to_vmem [thread:$0]  %s1, 8192, %s29, [#allocation6], 128, 128, 8
    $region9: #{tpu_custom_call.1} parent=1 // pred_fallthru
      _
    // Predicated region
    $region10: #{tpu_custom_call.1} parent=1 // pred_check
      _
    $region11: #{tpu_custom_call.1} parent=1 // pred_check_branch
      %36 = sbr.rel (0) target = $region13
    $region12: #{tpu_custom_call.1} parent=1 // pred_region
      _
    $region13: #{tpu_custom_call.1} parent=1 // pred_fallthru
      _
    // Predicated region
    $region14: #{tpu_custom_call.1} parent=1 // pred_check
      _
    $region15: #{tpu_custom_call.1} parent=1 // pred_check_branch
      %38 = sbr.rel (0) target = $region17
    $region16: #{tpu_custom_call.1} parent=1 // pred_region
      %39 = dma.done [#allocation3], 512
    $region17: #{tpu_custom_call.1} parent=1 // pred_fallthru
      _
    // Predicated region
    $region18: #{tpu_custom_call.1} parent=1 // pred_check
      _
    $region19: #{tpu_custom_call.1} parent=1 // pred_check_branch
      %41 = sbr.rel (0) target = $region21
    $region20: #{tpu_custom_call.1} parent=1 // pred_region
      %42 = dma.done [#allocation6], 8192
    $region21: #{tpu_custom_call.1} parent=1 // pred_fallthru
      _
    %v43 = vld [vmem:[#allocation2] sm:$0xf]
    %v44 = vld [vmem:[#allocation2 + $0x4] sm:$0xf]
    %v45 = vld [vmem:[#allocation2 + $0x8] sm:$0xf]
    %v46 = vld [vmem:[#allocation2 + $0xc] sm:$0xf]
    %v47 = vld [vmem:[#allocation2 + $0x10] sm:$0xf]
    %v48 = vld [vmem:[#allocation2 + $0x14] sm:$0xf]
    %v49 = vld [vmem:[#allocation2 + $0x18] sm:$0xf]
    %v50 = vld [vmem:[#allocation2 + $0x1c] sm:$0xf]
    %v51 = vld [vmem:[#allocation5] sm:$0xff]
    %v52 = vld [vmem:[#allocation5 + $0x8] sm:$0xff]
    %v53 = vld [vmem:[#allocation5 + $0x10] sm:$0xff]
    %v54 = vld [vmem:[#allocation5 + $0x18] sm:$0xff]
    %v55 = vld [vmem:[#allocation5 + $0x20] sm:$0xff]
    %v56 = vld [vmem:[#allocation5 + $0x28] sm:$0xff]
    %v57 = vld [vmem:[#allocation5 + $0x30] sm:$0xff]
    %v58 = vld [vmem:[#allocation5 + $0x38] sm:$0xff]
    %v59 = vld [vmem:[#allocation5 + $0x40] sm:$0xff]
    %v60 = vld [vmem:[#allocation5 + $0x48] sm:$0xff]
    %v61 = vld [vmem:[#allocation5 + $0x50] sm:$0xff]
    %v62 = vld [vmem:[#allocation5 + $0x58] sm:$0xff]
    %v63 = vld [vmem:[#allocation5 + $0x60] sm:$0xff]
    %v64 = vld [vmem:[#allocation5 + $0x68] sm:$0xff]
    %v65 = vld [vmem:[#allocation5 + $0x70] sm:$0xff]
    %v66 = vld [vmem:[#allocation5 + $0x78] sm:$0xff]
    %v67 = vld [vmem:[#allocation5 + $0x80] sm:$0xff]
    %v68 = vld [vmem:[#allocation5 + $0x88] sm:$0xff]
    %v69 = vld [vmem:[#allocation5 + $0x90] sm:$0xff]
    %v70 = vld [vmem:[#allocation5 + $0x98] sm:$0xff]
    %v71 = vld [vmem:[#allocation5 + $0xa0] sm:$0xff]
    %v72 = vld [vmem:[#allocation5 + $0xa8] sm:$0xff]
    %v73 = vld [vmem:[#allocation5 + $0xb0] sm:$0xff]
    %v74 = vld [vmem:[#allocation5 + $0xb8] sm:$0xff]
    %v75 = vld [vmem:[#allocation5 + $0xc0] sm:$0xff]
    %v76 = vld [vmem:[#allocation5 + $0xc8] sm:$0xff]
    %v77 = vld [vmem:[#allocation5 + $0xd0] sm:$0xff]
    %v78 = vld [vmem:[#allocation5 + $0xd8] sm:$0xff]
    %v79 = vld [vmem:[#allocation5 + $0xe0] sm:$0xff]
    %v80 = vld [vmem:[#allocation5 + $0xe8] sm:$0xff]
    %v81 = vld [vmem:[#allocation5 + $0xf0] sm:$0xff]
    %v82 = vld [vmem:[#allocation5 + $0xf8] sm:$0xff]
    %v83 = vld [vmem:[#allocation5 + $0x100] sm:$0xff]
    %v84 = vld [vmem:[#allocation5 + $0x108] sm:$0xff]
    %v85 = vld [vmem:[#allocation5 + $0x110] sm:$0xff]
    %v86 = vld [vmem:[#allocation5 + $0x118] sm:$0xff]
    %v87 = vld [vmem:[#allocation5 + $0x120] sm:$0xff]
    %v88 = vld [vmem:[#allocation5 + $0x128] sm:$0xff]
    %v89 = vld [vmem:[#allocation5 + $0x130] sm:$0xff]
    %v90 = vld [vmem:[#allocation5 + $0x138] sm:$0xff]
    %v91 = vld [vmem:[#allocation5 + $0x140] sm:$0xff]
    %v92 = vld [vmem:[#allocation5 + $0x148] sm:$0xff]
    %v93 = vld [vmem:[#allocation5 + $0x150] sm:$0xff]
    %v94 = vld [vmem:[#allocation5 + $0x158] sm:$0xff]
    %v95 = vld [vmem:[#allocation5 + $0x160] sm:$0xff]
    %v96 = vld [vmem:[#allocation5 + $0x168] sm:$0xff]
    %v97 = vld [vmem:[#allocation5 + $0x170] sm:$0xff]
    %v98 = vld [vmem:[#allocation5 + $0x178] sm:$0xff]
    %v99 = vld [vmem:[#allocation5 + $0x180] sm:$0xff]
    %v100 = vld [vmem:[#allocation5 + $0x188] sm:$0xff]
    %v101 = vld [vmem:[#allocation5 + $0x190] sm:$0xff]
    %v102 = vld [vmem:[#allocation5 + $0x198] sm:$0xff]
    %v103 = vld [vmem:[#allocation5 + $0x1a0] sm:$0xff]
    %v104 = vld [vmem:[#allocation5 + $0x1a8] sm:$0xff]
    %v105 = vld [vmem:[#allocation5 + $0x1b0] sm:$0xff]
    %v106 = vld [vmem:[#allocation5 + $0x1b8] sm:$0xff]
    %v107 = vld [vmem:[#allocation5 + $0x1c0] sm:$0xff]
    %v108 = vld [vmem:[#allocation5 + $0x1c8] sm:$0xff]
    %v109 = vld [vmem:[#allocation5 + $0x1d0] sm:$0xff]
    %v110 = vld [vmem:[#allocation5 + $0x1d8] sm:$0xff]
    %v111 = vld [vmem:[#allocation5 + $0x1e0] sm:$0xff]
    %v112 = vld [vmem:[#allocation5 + $0x1e8] sm:$0xff]
    %v113 = vld [vmem:[#allocation5 + $0x1f0] sm:$0xff]
    %v114 = vld [vmem:[#allocation5 + $0x1f8] sm:$0xff]
    %v115 = vld [vmem:[%s2] sm:$0x1]
    %v117 = vlaneseq
    %v118 = vshrl.u32 %v117, 7
    %v119 = vsub.s32 0, %v118
    %v120 = vrot.slane %v115, %v119
    %v130 = vcombine.low %v43, %v44
    %v131 = vcombine.low %v45, %v46
    %v132 = vcombine.low %v47, %v48
    %v133 = vcombine.low %v49, %v50
    %v135 = vunpack.c.l.s4 1966171168
    %v136 = vunpack.c.0.s8 %v135
    %v137 = vlaneseq
    %v138 = vshrl.u32 %v137, 7
    %v139 = vsub.s32 %v136, %v138
    %v140 = vrot.slane %v130, %v139
    %v142 = vunpack.c.l.s4 1966171168
    %v143 = vunpack.c.0.s8 %v142
    %v144 = vlaneseq
    %v145 = vshrl.u32 %v144, 7
    %v146 = vsub.s32 %v143, %v145
    %v147 = vrot.slane %v131, %v146
    %v149 = vunpack.c.l.s4 1966171168
    %v150 = vunpack.c.0.s8 %v149
    %v151 = vlaneseq
    %v152 = vshrl.u32 %v151, 7
    %v153 = vsub.s32 %v150, %v152
    %v154 = vrot.slane %v132, %v153
    %v156 = vunpack.c.l.s4 1966171168
    %v157 = vunpack.c.0.s8 %v156
    %v158 = vlaneseq
    %v159 = vshrl.u32 %v158, 7
    %v160 = vsub.s32 %v157, %v159
    %v161 = vrot.slane %v133, %v160
    %v162 = vcombine.low %v140, %v147
    %v163 = vcombine.high %v140, %v147
    %v164 = vcombine.low %v154, %v161
    %v165 = vcombine.high %v154, %v161
    %v167 = vunpack.c.l.s4 1966171168
    %v168 = vunpack.c.0.s8 %v167
    %v169 = vlaneseq
    %v170 = vshrl.u32 %v169, 7
    %v171 = vsub.s32 %v168, %v170
    %v172 = vrot.slane %v162, %v171
    %v174 = vunpack.c.l.s4 1966171168
    %v175 = vunpack.c.0.s8 %v174
    %v176 = vlaneseq
    %v177 = vshrl.u32 %v176, 7
    %v178 = vsub.s32 %v175, %v177
    %v179 = vrot.slane %v163, %v178
    %v181 = vunpack.c.l.s4 1966171168
    %v182 = vunpack.c.0.s8 %v181
    %v183 = vlaneseq
    %v184 = vshrl.u32 %v183, 7
    %v185 = vsub.s32 %v182, %v184
    %v186 = vrot.slane %v164, %v185
    %v188 = vunpack.c.l.s4 1966171168
    %v189 = vunpack.c.0.s8 %v188
    %v190 = vlaneseq
    %v191 = vshrl.u32 %v190, 7
    %v192 = vsub.s32 %v189, %v191
    %v193 = vrot.slane %v165, %v192
    %v194 = vcombine.low %v172, %v186
    %v195 = vcombine.high %v172, %v186
    %v196 = vcombine.low %v179, %v193
    %v197 = vcombine.high %v179, %v193
    %202 = vmatprep.subr.mxu0 0.0
    %203 = vmatpush1.msra.mxu0 %v66
    %204 = vmatprep.subr.mxu0 0.0
    %205 = vmatpush1.msra.mxu0 %v65
    %206 = vmatprep.subr.mxu0 0.0
    %207 = vmatpush1.msra.mxu0 %v64
    %208 = vmatprep.subr.mxu0 0.0
    %209 = vmatpush1.msra.mxu0 %v63
    %210 = vmatprep.subr.mxu0 0.0
    %211 = vmatpush1.msra.mxu0 %v62
    %212 = vmatprep.subr.mxu0 0.0
    %213 = vmatpush1.msra.mxu0 %v61
    %214 = vmatprep.subr.mxu0 0.0
    %215 = vmatpush1.msra.mxu0 %v60
    %216 = vmatprep.subr.mxu0 0.0
    %217 = vmatpush1.msra.mxu0 %v59
    %218 = vmatprep.subr.mxu0 0.0
    %219 = vmatpush1.msra.mxu0 %v58
    %220 = vmatprep.subr.mxu0 0.0
    %221 = vmatpush1.msra.mxu0 %v57
    %222 = vmatprep.subr.mxu0 0.0
    %223 = vmatpush1.msra.mxu0 %v56
    %224 = vmatprep.subr.mxu0 0.0
    %225 = vmatpush1.msra.mxu0 %v55
    %226 = vmatprep.subr.mxu0 0.0
    %227 = vmatpush1.msra.mxu0 %v54
    %228 = vmatprep.subr.mxu0 0.0
    %229 = vmatpush1.msra.mxu0 %v53
    %230 = vmatprep.subr.mxu0 0.0
    %231 = vmatpush1.msra.mxu0 %v52
    %232 = vmatprep.subr.mxu0 0.0
    %233 = vmatpush1.msra.mxu0 %v51
    %234 = vmatprep.subr.mxu0 0.0
    %235 = vmatpush2.msra.mxu0 %v82
    %236 = vmatprep.subr.mxu0 0.0
    %237 = vmatpush2.msra.mxu0 %v81
    %238 = vmatprep.subr.mxu0 0.0
    %239 = vmatpush2.msra.mxu0 %v80
    %240 = vmatprep.subr.mxu0 0.0
    %241 = vmatpush2.msra.mxu0 %v79
    %242 = vmatprep.subr.mxu0 0.0
    %243 = vmatpush2.msra.mxu0 %v78
    %244 = vmatprep.subr.mxu0 0.0
    %245 = vmatpush2.msra.mxu0 %v77
    %246 = vmatprep.subr.mxu0 0.0
    %247 = vmatpush2.msra.mxu0 %v76
    %248 = vmatprep.subr.mxu0 0.0
    %249 = vmatpush2.msra.mxu0 %v75
    %250 = vmatprep.subr.mxu0 0.0
    %251 = vmatpush2.msra.mxu0 %v74
    %252 = vmatprep.subr.mxu0 0.0
    %253 = vmatpush2.msra.mxu0 %v73
    %254 = vmatprep.subr.mxu0 0.0
    %255 = vmatpush2.msra.mxu0 %v72
    %256 = vmatprep.subr.mxu0 0.0
    %257 = vmatpush2.msra.mxu0 %v71
    %258 = vmatprep.subr.mxu0 0.0
    %259 = vmatpush2.msra.mxu0 %v70
    %260 = vmatprep.subr.mxu0 0.0
    %261 = vmatpush2.msra.mxu0 %v69
    %262 = vmatprep.subr.mxu0 0.0
    %263 = vmatpush2.msra.mxu0 %v68
    %264 = vmatprep.subr.mxu0 0.0
    %265 = vmatpush2.msra.mxu0 %v67
    %266 = vmatprep.mubr.f32.mxu0 %v196
    %267 = vmatmul.mubr.f32.gmra.mxu0 %v194
    %v268 = vpop.f32.mrf.mxu0
    %v269 = vadd.f32 %v120, %v268
    %v270 = vpop.f32.mrf.mxu0
    %271 = vdwg.mxu0
    %272 = vmatprep.subr.mxu0 0.0
    %273 = vmatpush1.msra.mxu0 %v98
    %274 = vmatprep.subr.mxu0 0.0
    %275 = vmatpush1.msra.mxu0 %v97
    %276 = vmatprep.subr.mxu0 0.0
    %277 = vmatpush1.msra.mxu0 %v96
    %278 = vmatprep.subr.mxu0 0.0
    %279 = vmatpush1.msra.mxu0 %v95
    %280 = vmatprep.subr.mxu0 0.0
    %281 = vmatpush1.msra.mxu0 %v94
    %282 = vmatprep.subr.mxu0 0.0
    %283 = vmatpush1.msra.mxu0 %v93
    %284 = vmatprep.subr.mxu0 0.0
    %285 = vmatpush1.msra.mxu0 %v92
    %286 = vmatprep.subr.mxu0 0.0
    %287 = vmatpush1.msra.mxu0 %v91
    %288 = vmatprep.subr.mxu0 0.0
    %289 = vmatpush1.msra.mxu0 %v90
    %290 = vmatprep.subr.mxu0 0.0
    %291 = vmatpush1.msra.mxu0 %v89
    %292 = vmatprep.subr.mxu0 0.0
    %293 = vmatpush1.msra.mxu0 %v88
    %294 = vmatprep.subr.mxu0 0.0
    %295 = vmatpush1.msra.mxu0 %v87
    %296 = vmatprep.subr.mxu0 0.0
    %297 = vmatpush1.msra.mxu0 %v86
    %298 = vmatprep.subr.mxu0 0.0
    %299 = vmatpush1.msra.mxu0 %v85
    %300 = vmatprep.subr.mxu0 0.0
    %301 = vmatpush1.msra.mxu0 %v84
    %302 = vmatprep.subr.mxu0 0.0
    %303 = vmatpush1.msra.mxu0 %v83
    %304 = vmatprep.subr.mxu0 0.0
    %305 = vmatpush2.msra.mxu0 %v114
    %306 = vmatprep.subr.mxu0 0.0
    %307 = vmatpush2.msra.mxu0 %v113
    %308 = vmatprep.subr.mxu0 0.0
    %309 = vmatpush2.msra.mxu0 %v112
    %310 = vmatprep.subr.mxu0 0.0
    %311 = vmatpush2.msra.mxu0 %v111
    %312 = vmatprep.subr.mxu0 0.0
    %313 = vmatpush2.msra.mxu0 %v110
    %314 = vmatprep.subr.mxu0 0.0
    %315 = vmatpush2.msra.mxu0 %v109
    %316 = vmatprep.subr.mxu0 0.0
    %317 = vmatpush2.msra.mxu0 %v108
    %318 = vmatprep.subr.mxu0 0.0
    %319 = vmatpush2.msra.mxu0 %v107
    %320 = vmatprep.subr.mxu0 0.0
    %321 = vmatpush2.msra.mxu0 %v106
    %322 = vmatprep.subr.mxu0 0.0
    %323 = vmatpush2.msra.mxu0 %v105
    %324 = vmatprep.subr.mxu0 0.0
    %325 = vmatpush2.msra.mxu0 %v104
    %326 = vmatprep.subr.mxu0 0.0
    %327 = vmatpush2.msra.mxu0 %v103
    %328 = vmatprep.subr.mxu0 0.0
    %329 = vmatpush2.msra.mxu0 %v102
    %330 = vmatprep.subr.mxu0 0.0
    %331 = vmatpush2.msra.mxu0 %v101
    %332 = vmatprep.subr.mxu0 0.0
    %333 = vmatpush2.msra.mxu0 %v100
    %334 = vmatprep.subr.mxu0 0.0
    %335 = vmatpush2.msra.mxu0 %v99
    %336 = vmatprep.mubr.f32.mxu0 %v197
    %337 = vmatmul.mubr.f32.gmra.mxu0 %v195
    %v338 = vpop.f32.mrf.mxu0
    %v339 = vadd.f32 %v269, %v338
    %v340 = vpop.f32.mrf.mxu0
    %341 = vdwg.mxu0
    %v342 = vtanh.pop %v339
    %343 = vst [vmem:[#allocation7] sm:$0xff] %v342
    // Predicated region
    $region22: #{tpu_custom_call.1} parent=1 // pred_check
      _
    $region23: #{tpu_custom_call.1} parent=1 // pred_check_branch
      %345 = sbr.rel (0) target = $region25
    $region24: #{tpu_custom_call.1} parent=1 // pred_region
      %s347 = ssub.s32 128, 16
      %348 = vsyncadd [#allocation4], %s347
      %s349 = sshll.u32 [#allocation7], 4
      %s350 = int_to_ptr.vmem [resolvable:$true] %s349
      %355 = dma.vmem_to_hbm [thread:$0]  %s350, 16, %s3, [#allocation4], 16, 16, 1
    $region25: #{tpu_custom_call.1} parent=1 // pred_fallthru
      _
    // Predicated region
    $region26: #{tpu_custom_call.1} parent=1 // pred_check
      _
    $region27: #{tpu_custom_call.1} parent=1 // pred_check_branch
      %357 = sbr.rel (0) target = $region29
    $region28: #{tpu_custom_call.1} parent=1 // pred_region
      %358 = dma.done [#allocation4], 128
    $region29: #{tpu_custom_call.1} parent=1 // pred_fallthru
      _
    %359 = vsyncpa [#allocation3], 1
    %360 = vsyncpa [#allocation6], 1
    %361 = vsyncpa [#allocation4], 1

</llo_original>
